<compile_context>
chip_gen: v7x
topology: tpu7x:2x2x1
jax: 0.10.0
libtpu: 0.0.40
codegen_flags: <defaults>
</compile_context>

<pallas_src>
import jax
import jax.numpy as jnp
from jax.experimental import pallas as pl
from jax.experimental.pallas import tpu as pltpu


_LANE = 128  # vreg lane width: last dim of the slab maps to the 128-lane axis


def _elementwise_kernel(x_ref, add_ref, sub_ref, mul_ref, div_ref,
                        lt_ref, gt_ref, eq_ref):
    x = x_ref[...]
    two = jnp.asarray(2.0, dtype=x.dtype)
    add_ref[...] = x + two
    sub_ref[...] = x - two
    mul_ref[...] = x * two
    # x * 0.5 is bit-exact for x / 2 only because the divisor is a power of
    # two; switch to an actual divide if the constant ever changes.
    div_ref[...] = x * jnp.asarray(0.5, dtype=x.dtype)
    # Masks: written in the output dtype (bool if supported, else uint8).
    lt_ref[...] = (x < two).astype(lt_ref.dtype)
    gt_ref[...] = (x > two).astype(gt_ref.dtype)
    eq_ref[...] = (x == two).astype(eq_ref.dtype)


def _round_up(n, m):
    return ((n + m - 1) // m) * m


def _tile_budget_for_device():
    """Returns (max_tile_rows, min_grid_steps) per TPU generation.

    Double-buffered footprint per element is ~46 B (f32 in + 4 f32 out +
    3x1 B masks, x2 buffers):
      2048 rows -> ~11.5 MiB  (fits v5e's 16 MiB default scoped VMEM)
      4096 rows -> ~23.0 MiB  (fits v6e/v7x's 32 MiB default scoped VMEM)
    """
    try:
        kind = jax.devices()[0].device_kind.lower()
    except Exception:
        kind = ""
    if "v7" in kind:
        return 4096, 2      # keep >=2 grid steps so both TensorCores get work
    if "v6" in kind:
        return 4096, 1
    # v5e / v5p / unknown: conservative (safe under 16 MiB scoped VMEM)
    return 2048, 1


def _pick_tile_rows(rows, max_tile_rows, min_steps):
    if min_steps > 1 and rows > 64:
        target = _round_up(pl.cdiv(rows, min_steps), 32)
    else:
        target = max_tile_rows
    tr = min(max_tile_rows, target)
    if tr >= rows:
        return rows                # single block == full array (always legal)
    return _round_up(tr, 32)       # keep int8/f32 native-tile divisibility


def pt_module_forward(x):
    """Pallas implementation of PtModule.forward.

    Returns a dict with the same keys/shapes/dtypes as the PyTorch module:
    input-dtype arrays for the arithmetic ops, bool arrays for comparisons.
    """
    orig_shape = x.shape
    if not jnp.issubdtype(x.dtype, jnp.floating):
        x = x.astype(jnp.float32)
    total = x.size
    x_flat = x.reshape(-1)

    # Pad only to a multiple of 128 elements (no-op for typical NCHW sizes).
    rem = total % _LANE
    padded = total if rem == 0 else total + (_LANE - rem)
    if padded != total:
        x_flat = jnp.pad(x_flat, (0, padded - total))
    rows = padded // _LANE
    x2d = x_flat.reshape(rows, _LANE)

    max_tr, min_steps = _tile_budget_for_device()
    tile_rows = _pick_tile_rows(rows, max_tr, min_steps)
    grid = (pl.cdiv(rows, tile_rows),)
    block = pl.BlockSpec((tile_rows, _LANE), lambda i: (i, 0))

    itemsize = jnp.dtype(x.dtype).itemsize

    def run(mask_dtype):
        float_shape = jax.ShapeDtypeStruct((rows, _LANE), x.dtype)
        mask_shape = jax.ShapeDtypeStruct((rows, _LANE), mask_dtype)
        return pl.pallas_call(
            _elementwise_kernel,
            out_shape=(float_shape, float_shape, float_shape, float_shape,
                       mask_shape, mask_shape, mask_shape),
            grid=grid,
            in_specs=[block],
            out_specs=(block,) * 7,
            compiler_params=pltpu.CompilerParams(
                # Purely elementwise per-tile work: shard the grid across both
                # TensorCores on v7x; no-op on single-TC v5e/v6e.
                dimension_semantics=("parallel",),
            ),
            # Memory-bound hint: 1 read + 4 arith writes (input dtype) +
            # 3 mask writes (1 B) per element, ~7 flops per element.
            cost_estimate=pl.CostEstimate(
                flops=7 * padded,
                transcendentals=0,
                bytes_accessed=(5 * itemsize + 3) * padded,
            ),
        )(x2d)

    try:
        outs = run(jnp.bool_)       # bool written in-kernel: no wrapper cast pass
        cast_masks = False
    except Exception:
        # TODO(synk): this backend rejected bool stores from the kernel; fall
        # back to uint8 masks + a single wrapper-side cast.
        outs = run(jnp.uint8)
        cast_masks = True

    def _unflatten(a, to_bool=False):
        if padded != total:
            a = a.reshape(-1)[:total]
        a = a.reshape(orig_shape)
        if to_bool and a.dtype != jnp.bool_:
            a = a.astype(jnp.bool_)
        return a

    add, sub, mul, div, lt, gt, eq = outs
    _ = cast_masks  # handled inside _unflatten via dtype check
    return {
        'addition': _unflatten(add),
        'subtraction': _unflatten(sub),
        'multiplication': _unflatten(mul),
        'division': _unflatten(div),
        'less_than': _unflatten(lt, to_bool=True),
        'greater_than': _unflatten(gt, to_bool=True),
        'equal_to': _unflatten(eq, to_bool=True),
    }


if __name__ == "__main__":
    key = jax.random.PRNGKey(0)
    # NCHW-style small input: batch=2, channels=4, spatial=16x16
    x = jax.random.normal(key, (2, 4, 16, 16), dtype=jnp.float32) * 3.0
    # make sure the "equal_to" branch has at least one True
    x = x.at[0, 0, 0, 0].set(2.0)

    out = pt_module_forward(x)
    jax.block_until_ready(out)

    # correctness check against plain JAX reference
    ref = {
        'addition': x + 2,
        'subtraction': x - 2,
        'multiplication': x * 2,
        'division': x / 2,
        'less_than': x < 2,
        'greater_than': x > 2,
        'equal_to': x == 2,
    }
    for k in ref:
        assert out[k].shape == ref[k].shape, k
        assert out[k].dtype == ref[k].dtype, k
        assert bool(jnp.all(out[k] == ref[k])), k

    print("KERNEL_OK")
</pallas_src>

<mosaic_0001>
module attributes {stable_mosaic.version = 11 : i64} {
  func.func @_elementwise_kernel(%arg0: i32, %arg1: memref<16x128xf32, #tpu.memory_space<vmem>>, %arg2: memref<16x128xf32, #tpu.memory_space<vmem>>, %arg3: memref<16x128xf32, #tpu.memory_space<vmem>>, %arg4: memref<16x128xf32, #tpu.memory_space<vmem>>, %arg5: memref<16x128xf32, #tpu.memory_space<vmem>>, %arg6: memref<16x128xi32, #tpu.memory_space<vmem>>, %arg7: memref<16x128xi32, #tpu.memory_space<vmem>>, %arg8: memref<16x128xi32, #tpu.memory_space<vmem>>) attributes {dimension_semantics = [#tpu.dimension_semantics<parallel>], iteration_bounds = array<i64: 1>, scalar_prefetch = 0 : i64, scratch_operands = 0 : i64, tpu.core_type = #tpu.core_type<tc>, window_params = [{transform_indices = @transform_0, window_bounds = array<i64: 16, 128>}, {transform_indices = @transform_1, window_bounds = array<i64: 16, 128>}, {transform_indices = @transform_2, window_bounds = array<i64: 16, 128>}, {transform_indices = @transform_3, window_bounds = array<i64: 16, 128>}, {transform_indices = @transform_4, window_bounds = array<i64: 16, 128>}, {transform_indices = @transform_5, window_bounds = array<i64: 16, 128>}, {transform_indices = @transform_6, window_bounds = array<i64: 16, 128>}, {transform_indices = @transform_7, window_bounds = array<i64: 16, 128>}]} {
    %c0 = arith.constant 0 : index
    %c0_0 = arith.constant 0 : index
    %0 = vector.load %arg1[%c0, %c0_0] : memref<16x128xf32, #tpu.memory_space<vmem>>, vector<16x128xf32>
    %cst = arith.constant 2.000000e+00 : f32
    %1 = vector.broadcast %cst : f32 to vector<16x128xf32>
    %2 = arith.addf %0, %1 : vector<16x128xf32>
    %c0_1 = arith.constant 0 : index
    %c0_2 = arith.constant 0 : index
    %3 = vector.load %arg2[%c0_1, %c0_2] : memref<16x128xf32, #tpu.memory_space<vmem>>, vector<16x128xf32>
    tpu.vector_store %arg2[%c0_1, %c0_2], %2 {strides = array<i32>} : memref<16x128xf32, #tpu.memory_space<vmem>>, vector<16x128xf32>,
    %cst_3 = arith.constant 2.000000e+00 : f32
    %4 = vector.broadcast %cst_3 : f32 to vector<16x128xf32>
    %5 = arith.subf %0, %4 : vector<16x128xf32>
    %c0_4 = arith.constant 0 : index
    %c0_5 = arith.constant 0 : index
    %6 = vector.load %arg3[%c0_4, %c0_5] : memref<16x128xf32, #tpu.memory_space<vmem>>, vector<16x128xf32>
    tpu.vector_store %arg3[%c0_4, %c0_5], %5 {strides = array<i32>} : memref<16x128xf32, #tpu.memory_space<vmem>>, vector<16x128xf32>,
    %cst_6 = arith.constant 2.000000e+00 : f32
    %7 = vector.broadcast %cst_6 : f32 to vector<16x128xf32>
    %8 = arith.mulf %0, %7 : vector<16x128xf32>
    %c0_7 = arith.constant 0 : index
    %c0_8 = arith.constant 0 : index
    %9 = vector.load %arg4[%c0_7, %c0_8] : memref<16x128xf32, #tpu.memory_space<vmem>>, vector<16x128xf32>
    tpu.vector_store %arg4[%c0_7, %c0_8], %8 {strides = array<i32>} : memref<16x128xf32, #tpu.memory_space<vmem>>, vector<16x128xf32>,
    %cst_9 = arith.constant 5.000000e-01 : f32
    %10 = vector.broadcast %cst_9 : f32 to vector<16x128xf32>
    %11 = arith.mulf %0, %10 : vector<16x128xf32>
    %c0_10 = arith.constant 0 : index
    %c0_11 = arith.constant 0 : index
    %12 = vector.load %arg5[%c0_10, %c0_11] : memref<16x128xf32, #tpu.memory_space<vmem>>, vector<16x128xf32>
    tpu.vector_store %arg5[%c0_10, %c0_11], %11 {strides = array<i32>} : memref<16x128xf32, #tpu.memory_space<vmem>>, vector<16x128xf32>,
    %cst_12 = arith.constant 2.000000e+00 : f32
    %13 = vector.broadcast %cst_12 : f32 to vector<16x128xf32>
    %14 = arith.cmpf olt, %0, %13 : vector<16x128xf32>
    %c0_13 = arith.constant 0 : index
    %c0_14 = arith.constant 0 : index
    %15 = vector.load %arg6[%c0_13, %c0_14] : memref<16x128xi32, #tpu.memory_space<vmem>>, vector<16x128xi32>
    %16 = arith.extui %14 : vector<16x128xi1> to vector<16x128xi32>
    %cst_15 = arith.constant dense<0> : vector<16x128xi32>
    %17 = arith.cmpi ne, %15, %cst_15 : vector<16x128xi32>
    tpu.vector_store %arg6[%c0_13, %c0_14], %16 {strides = array<i32>} : memref<16x128xi32, #tpu.memory_space<vmem>>, vector<16x128xi32>,
    %cst_16 = arith.constant 2.000000e+00 : f32
    %18 = vector.broadcast %cst_16 : f32 to vector<16x128xf32>
    %19 = arith.cmpf ogt, %0, %18 : vector<16x128xf32>
    %c0_17 = arith.constant 0 : index
    %c0_18 = arith.constant 0 : index
    %20 = vector.load %arg7[%c0_17, %c0_18] : memref<16x128xi32, #tpu.memory_space<vmem>>, vector<16x128xi32>
    %21 = arith.extui %19 : vector<16x128xi1> to vector<16x128xi32>
    %cst_19 = arith.constant dense<0> : vector<16x128xi32>
    %22 = arith.cmpi ne, %20, %cst_19 : vector<16x128xi32>
    tpu.vector_store %arg7[%c0_17, %c0_18], %21 {strides = array<i32>} : memref<16x128xi32, #tpu.memory_space<vmem>>, vector<16x128xi32>,
    %cst_20 = arith.constant 2.000000e+00 : f32
    %23 = vector.broadcast %cst_20 : f32 to vector<16x128xf32>
    %24 = arith.cmpf oeq, %0, %23 : vector<16x128xf32>
    %c0_21 = arith.constant 0 : index
    %c0_22 = arith.constant 0 : index
    %25 = vector.load %arg8[%c0_21, %c0_22] : memref<16x128xi32, #tpu.memory_space<vmem>>, vector<16x128xi32>
    %26 = arith.extui %24 : vector<16x128xi1> to vector<16x128xi32>
    %cst_23 = arith.constant dense<0> : vector<16x128xi32>
    %27 = arith.cmpi ne, %25, %cst_23 : vector<16x128xi32>
    tpu.vector_store %arg8[%c0_21, %c0_22], %26 {strides = array<i32>} : memref<16x128xi32, #tpu.memory_space<vmem>>, vector<16x128xi32>,
    return
  }
  func.func @transform_0(%arg0: i32) -> (i32, i32) {
    %c0_i32 = arith.constant 0 : i32
    %c0_i32_0 = arith.constant 0 : i32
    return %arg0, %c0_i32 : i32, i32
  }
  func.func @transform_1(%arg0: i32) -> (i32, i32) {
    %c0_i32 = arith.constant 0 : i32
    %c0_i32_0 = arith.constant 0 : i32
    return %arg0, %c0_i32 : i32, i32
  }
  func.func @transform_2(%arg0: i32) -> (i32, i32) {
    %c0_i32 = arith.constant 0 : i32
    %c0_i32_0 = arith.constant 0 : i32
    return %arg0, %c0_i32 : i32, i32
  }
  func.func @transform_3(%arg0: i32) -> (i32, i32) {
    %c0_i32 = arith.constant 0 : i32
    %c0_i32_0 = arith.constant 0 : i32
    return %arg0, %c0_i32 : i32, i32
  }
  func.func @transform_4(%arg0: i32) -> (i32, i32) {
    %c0_i32 = arith.constant 0 : i32
    %c0_i32_0 = arith.constant 0 : i32
    return %arg0, %c0_i32 : i32, i32
  }
  func.func @transform_5(%arg0: i32) -> (i32, i32) {
    %c0_i32 = arith.constant 0 : i32
    %c0_i32_0 = arith.constant 0 : i32
    return %arg0, %c0_i32 : i32, i32
  }
  func.func @transform_6(%arg0: i32) -> (i32, i32) {
    %c0_i32 = arith.constant 0 : i32
    %c0_i32_0 = arith.constant 0 : i32
    return %arg0, %c0_i32 : i32, i32
  }
  func.func @transform_7(%arg0: i32) -> (i32, i32) {
    %c0_i32 = arith.constant 0 : i32
    %c0_i32_0 = arith.constant 0 : i32
    return %arg0, %c0_i32 : i32, i32
  }
}

module attributes {stable_mosaic.version = 11 : i64} {
  func.func @_elementwise_kernel(%arg0: i32, %arg1: memref<16x128xf32, #tpu.memory_space<vmem>>, %arg2: memref<16x128xf32, #tpu.memory_space<vmem>>, %arg3: memref<16x128xf32, #tpu.memory_space<vmem>>, %arg4: memref<16x128xf32, #tpu.memory_space<vmem>>, %arg5: memref<16x128xf32, #tpu.memory_space<vmem>>, %arg6: memref<16x128xi8, #tpu.memory_space<vmem>>, %arg7: memref<16x128xi8, #tpu.memory_space<vmem>>, %arg8: memref<16x128xi8, #tpu.memory_space<vmem>>) attributes {dimension_semantics = [#tpu.dimension_semantics<parallel>], iteration_bounds = array<i64: 1>, scalar_prefetch = 0 : i64, scratch_operands = 0 : i64, tpu.core_type = #tpu.core_type<tc>, window_params = [{transform_indices = @transform_0, window_bounds = array<i64: 16, 128>}, {transform_indices = @transform_1, window_bounds = array<i64: 16, 128>}, {transform_indices = @transform_2, window_bounds = array<i64: 16, 128>}, {transform_indices = @transform_3, window_bounds = array<i64: 16, 128>}, {transform_indices = @transform_4, window_bounds = array<i64: 16, 128>}, {transform_indices = @transform_5, window_bounds = array<i64: 16, 128>}, {transform_indices = @transform_6, window_bounds = array<i64: 16, 128>}, {transform_indices = @transform_7, window_bounds = array<i64: 16, 128>}]} {
    %c0 = arith.constant 0 : index
    %c0_0 = arith.constant 0 : index
    %0 = vector.load %arg1[%c0, %c0_0] : memref<16x128xf32, #tpu.memory_space<vmem>>, vector<16x128xf32>
    %cst = arith.constant 2.000000e+00 : f32
    %1 = vector.broadcast %cst : f32 to vector<16x128xf32>
    %2 = arith.addf %0, %1 : vector<16x128xf32>
    %c0_1 = arith.constant 0 : index
    %c0_2 = arith.constant 0 : index
    %3 = vector.load %arg2[%c0_1, %c0_2] : memref<16x128xf32, #tpu.memory_space<vmem>>, vector<16x128xf32>
    tpu.vector_store %arg2[%c0_1, %c0_2], %2 {strides = array<i32>} : memref<16x128xf32, #tpu.memory_space<vmem>>, vector<16x128xf32>,
    %cst_3 = arith.constant 2.000000e+00 : f32
    %4 = vector.broadcast %cst_3 : f32 to vector<16x128xf32>
    %5 = arith.subf %0, %4 : vector<16x128xf32>
    %c0_4 = arith.constant 0 : index
    %c0_5 = arith.constant 0 : index
    %6 = vector.load %arg3[%c0_4, %c0_5] : memref<16x128xf32, #tpu.memory_space<vmem>>, vector<16x128xf32>
    tpu.vector_store %arg3[%c0_4, %c0_5], %5 {strides = array<i32>} : memref<16x128xf32, #tpu.memory_space<vmem>>, vector<16x128xf32>,
    %cst_6 = arith.constant 2.000000e+00 : f32
    %7 = vector.broadcast %cst_6 : f32 to vector<16x128xf32>
    %8 = arith.mulf %0, %7 : vector<16x128xf32>
    %c0_7 = arith.constant 0 : index
    %c0_8 = arith.constant 0 : index
    %9 = vector.load %arg4[%c0_7, %c0_8] : memref<16x128xf32, #tpu.memory_space<vmem>>, vector<16x128xf32>
    tpu.vector_store %arg4[%c0_7, %c0_8], %8 {strides = array<i32>} : memref<16x128xf32, #tpu.memory_space<vmem>>, vector<16x128xf32>,
    %cst_9 = arith.constant 5.000000e-01 : f32
    %10 = vector.broadcast %cst_9 : f32 to vector<16x128xf32>
    %11 = arith.mulf %0, %10 : vector<16x128xf32>
    %c0_10 = arith.constant 0 : index
    %c0_11 = arith.constant 0 : index
    %12 = vector.load %arg5[%c0_10, %c0_11] : memref<16x128xf32, #tpu.memory_space<vmem>>, vector<16x128xf32>
    tpu.vector_store %arg5[%c0_10, %c0_11], %11 {strides = array<i32>} : memref<16x128xf32, #tpu.memory_space<vmem>>, vector<16x128xf32>,
    %cst_12 = arith.constant 2.000000e+00 : f32
    %13 = vector.broadcast %cst_12 : f32 to vector<16x128xf32>
    %14 = arith.cmpf olt, %0, %13 : vector<16x128xf32>
    %15 = arith.extui %14 : vector<16x128xi1> to vector<16x128xi8>
    %c0_13 = arith.constant 0 : index
    %c0_14 = arith.constant 0 : index
    %16 = vector.load %arg6[%c0_13, %c0_14] : memref<16x128xi8, #tpu.memory_space<vmem>>, vector<16x128xi8>
    tpu.vector_store %arg6[%c0_13, %c0_14], %15 {strides = array<i32>} : memref<16x128xi8, #tpu.memory_space<vmem>>, vector<16x128xi8>,
    %cst_15 = arith.constant 2.000000e+00 : f32
    %17 = vector.broadcast %cst_15 : f32 to vector<16x128xf32>
    %18 = arith.cmpf ogt, %0, %17 : vector<16x128xf32>
    %19 = arith.extui %18 : vector<16x128xi1> to vector<16x128xi8>
    %c0_16 = arith.constant 0 : index
    %c0_17 = arith.constant 0 : index
    %20 = vector.load %arg7[%c0_16, %c0_17] : memref<16x128xi8, #tpu.memory_space<vmem>>, vector<16x128xi8>
    tpu.vector_store %arg7[%c0_16, %c0_17], %19 {strides = array<i32>} : memref<16x128xi8, #tpu.memory_space<vmem>>, vector<16x128xi8>,
    %cst_18 = arith.constant 2.000000e+00 : f32
    %21 = vector.broadcast %cst_18 : f32 to vector<16x128xf32>
    %22 = arith.cmpf oeq, %0, %21 : vector<16x128xf32>
    %23 = arith.extui %22 : vector<16x128xi1> to vector<16x128xi8>
    %c0_19 = arith.constant 0 : index
    %c0_20 = arith.constant 0 : index
    %24 = vector.load %arg8[%c0_19, %c0_20] : memref<16x128xi8, #tpu.memory_space<vmem>>, vector<16x128xi8>
    tpu.vector_store %arg8[%c0_19, %c0_20], %23 {strides = array<i32>} : memref<16x128xi8, #tpu.memory_space<vmem>>, vector<16x128xi8>,
    return
  }
  func.func @transform_0(%arg0: i32) -> (i32, i32) {
    %c0_i32 = arith.constant 0 : i32
    %c0_i32_0 = arith.constant 0 : i32
    return %arg0, %c0_i32 : i32, i32
  }
  func.func @transform_1(%arg0: i32) -> (i32, i32) {
    %c0_i32 = arith.constant 0 : i32
    %c0_i32_0 = arith.constant 0 : i32
    return %arg0, %c0_i32 : i32, i32
  }
  func.func @transform_2(%arg0: i32) -> (i32, i32) {
    %c0_i32 = arith.constant 0 : i32
    %c0_i32_0 = arith.constant 0 : i32
    return %arg0, %c0_i32 : i32, i32
  }
  func.func @transform_3(%arg0: i32) -> (i32, i32) {
    %c0_i32 = arith.constant 0 : i32
    %c0_i32_0 = arith.constant 0 : i32
    return %arg0, %c0_i32 : i32, i32
  }
  func.func @transform_4(%arg0: i32) -> (i32, i32) {
    %c0_i32 = arith.constant 0 : i32
    %c0_i32_0 = arith.constant 0 : i32
    return %arg0, %c0_i32 : i32, i32
  }
  func.func @transform_5(%arg0: i32) -> (i32, i32) {
    %c0_i32 = arith.constant 0 : i32
    %c0_i32_0 = arith.constant 0 : i32
    return %arg0, %c0_i32 : i32, i32
  }
  func.func @transform_6(%arg0: i32) -> (i32, i32) {
    %c0_i32 = arith.constant 0 : i32
    %c0_i32_0 = arith.constant 0 : i32
    return %arg0, %c0_i32 : i32, i32
  }
  func.func @transform_7(%arg0: i32) -> (i32, i32) {
    %c0_i32 = arith.constant 0 : i32
    %c0_i32_0 = arith.constant 0 : i32
    return %arg0, %c0_i32 : i32, i32
  }
}

</mosaic_0001>

<llo_original>
// kernel: tpu_custom_call.1
$region0: #{tpu_custom_call.1}
  #allocation0 [shape = 'u32[]', space=smem, size = 0x4, offset = 0x4, fixed_abs, tag = 'smem constant byte address 0x4 - core index']
  #allocation1 [shape = 'u32[144,128]{1,0:T(1,128)}', space=vmem, size = 0x12000, scoped, tag = 'internal scratch']
  %s0 = inlined_call_operand.hbm [shape: f32[16,128], index: 0, kind: input, shape index: {}]
  %s1 = inlined_call_operand.hbm [shape: f32[16,128], index: 1, kind: output, shape index: {0}]
  %s2 = inlined_call_operand.hbm [shape: f32[16,128], index: 2, kind: output, shape index: {1}]
  %s3 = inlined_call_operand.hbm [shape: f32[16,128], index: 3, kind: output, shape index: {2}]
  %s4 = inlined_call_operand.hbm [shape: f32[16,128], index: 4, kind: output, shape index: {3}]
  %s5 = inlined_call_operand.vmem [shape: s32[16,128], index: 5, kind: output, shape index: {4}]
  %s6 = inlined_call_operand.vmem [shape: s32[16,128], index: 6, kind: output, shape index: {5}]
  %s7 = inlined_call_operand.vmem [shape: s32[16,128], index: 7, kind: output, shape index: {6}]
  %8 = xla_tuple %s1, %s2, %s3, %s4, %s5, %s6, %s7
  %s9 = sld [smem:[#allocation0]]
  $region66: #{tpu_custom_call.1} parent=0
    _
  %s11 = ssub.s32 1, %s9
  %s12 = scalar_select 0, %s11, %s9
  $region1: #{tpu_custom_call.1} parent=0
    #allocation2 [shape = 'u8[8192]{0}', space=vmem, size = 0x2000, scoped, tag = 'input window, operand 0, single buffered']
    #allocation3 [shape = 's32[1]{0}', space=sflag, size = 0x4, scoped, tag = 'scoped memory for tpu_custom_call.1']
    #allocation4 [shape = 's32[1]{0}', space=sflag, size = 0x4, scoped, tag = 'scoped memory for tpu_custom_call.1']
    #allocation5 [shape = 'u8[8192]{0}', space=vmem, size = 0x2000, scoped, tag = 'output window, operand 0, single buffered']
    #allocation6 [shape = 'u8[8192]{0}', space=vmem, size = 0x2000, scoped, tag = 'output window, operand 1, single buffered']
    #allocation7 [shape = 's32[1]{0}', space=sflag, size = 0x4, scoped, tag = 'scoped memory for tpu_custom_call.1']
    #allocation8 [shape = 'u8[8192]{0}', space=vmem, size = 0x2000, scoped, tag = 'output window, operand 2, single buffered']
    #allocation9 [shape = 'u8[8192]{0}', space=vmem, size = 0x2000, scoped, tag = 'output window, operand 3, single buffered']
    #allocation10 [shape = 's32[1]{0}', space=sflag, size = 0x4, scoped, tag = 'scoped memory for tpu_custom_call.1']
    %13 = vsyncpa [#allocation3], 0
    %14 = vsyncpa [#allocation4], 0
    %15 = vsyncpa [#allocation7], 0
    %16 = vsyncpa [#allocation10], 0
    // Predicated region
    $region2: #{tpu_custom_call.1} parent=1 // pred_check
      _
    $region3: #{tpu_custom_call.1} parent=1 // pred_check_branch
      %18 = sbr.rel (0) target = $region5
    $region4: #{tpu_custom_call.1} parent=1 // pred_region
      %s20 = ssub.s32 256, 256
      %21 = vsyncadd [#allocation3], %s20
      %s22 = sshll.u32 [#allocation2], 4
      %s23 = int_to_ptr.vmem [resolvable:$true] %s22
      %28 = dma.hbm_to_vmem [thread:$0]  %s0, 256, %s23, [#allocation3], 128, 128, 8
    $region5: #{tpu_custom_call.1} parent=1 // pred_fallthru
      _
    // Predicated region
    $region6: #{tpu_custom_call.1} parent=1 // pred_check
      _
    $region7: #{tpu_custom_call.1} parent=1 // pred_check_branch
      %30 = sbr.rel (0) target = $region9
    $region8: #{tpu_custom_call.1} parent=1 // pred_region
      %31 = dma.done [#allocation3], 256
    $region9: #{tpu_custom_call.1} parent=1 // pred_fallthru
      _
    %v32 = vld [vmem:[#allocation2] sm:$0xff]
    %v33 = vld [vmem:[#allocation2 + $0x8] sm:$0xff]
    %v34 = vadd.f32 %v32, 2.0
    %v35 = vadd.f32 %v33, 2.0
    %36 = vst [vmem:[#allocation5] sm:$0xff] %v34
    %37 = vst [vmem:[#allocation5 + $0x8] sm:$0xff] %v35
    %v38 = vsub.f32 %v32, 2.0
    %v39 = vsub.f32 %v33, 2.0
    %40 = vst [vmem:[#allocation6] sm:$0xff] %v38
    %41 = vst [vmem:[#allocation6 + $0x8] sm:$0xff] %v39
    %v42 = vmul.f32 %v32, 2.0
    %v43 = vmul.f32 %v33, 2.0
    %44 = vst [vmem:[#allocation8] sm:$0xff] %v42
    %45 = vst [vmem:[#allocation8 + $0x8] sm:$0xff] %v43
    %v46 = vmul.f32 %v32, 0.5
    %v47 = vmul.f32 %v33, 0.5
    %48 = vst [vmem:[#allocation9] sm:$0xff] %v46
    %49 = vst [vmem:[#allocation9 + $0x8] sm:$0xff] %v47
    %vm50 = vcmp.lt.f32.partialorder %v32, 2.0
    %vm51 = vcmp.lt.f32.partialorder %v33, 2.0
    %v52 = vsel %vm50, 1, 0
    %v53 = vsel %vm51, 1, 0
    %54 = vst [vmem:[%s5] sm:$0xff] %v52
    %55 = vst [vmem:[%s5 + $0x8] sm:$0xff] %v53
    %vm56 = vcmp.gt.f32.partialorder %v32, 2.0
    %vm57 = vcmp.gt.f32.partialorder %v33, 2.0
    %v58 = vsel %vm56, 1, 0
    %v59 = vsel %vm57, 1, 0
    %60 = vst [vmem:[%s6] sm:$0xff] %v58
    %61 = vst [vmem:[%s6 + $0x8] sm:$0xff] %v59
    %vm62 = vcmp.eq.f32.partialorder %v32, 2.0
    %vm63 = vcmp.eq.f32.partialorder %v33, 2.0
    %v64 = vsel %vm62, 1, 0
    %v65 = vsel %vm63, 1, 0
    %66 = vst [vmem:[%s7] sm:$0xff] %v64
    %67 = vst [vmem:[%s7 + $0x8] sm:$0xff] %v65
    // Predicated region
    $region10: #{tpu_custom_call.1} parent=1 // pred_check
      _
    $region11: #{tpu_custom_call.1} parent=1 // pred_check_branch
      %69 = sbr.rel (0) target = $region13
    $region12: #{tpu_custom_call.1} parent=1 // pred_region
      %s71 = ssub.s32 256, 256
      %72 = vsyncadd [#allocation4], %s71
      %s73 = sshll.u32 [#allocation5], 4
      %s74 = int_to_ptr.vmem [resolvable:$true] %s73
      %79 = dma.vmem_to_hbm [thread:$0]  %s74, 256, %s1, [#allocation4], 128, 128, 8
    $region13: #{tpu_custom_call.1} parent=1 // pred_fallthru
      _
    // Predicated region
    $region14: #{tpu_custom_call.1} parent=1 // pred_check
      _
    $region15: #{tpu_custom_call.1} parent=1 // pred_check_branch
      %81 = sbr.rel (0) target = $region17
    $region16: #{tpu_custom_call.1} parent=1 // pred_region
      %s83 = ssub.s32 256, 256
      %84 = vsyncadd [#allocation7], %s83
      %s85 = sshll.u32 [#allocation6], 4
      %s86 = int_to_ptr.vmem [resolvable:$true] %s85
      %91 = dma.vmem_to_hbm [thread:$0]  %s86, 256, %s2, [#allocation7], 128, 128, 8
    $region17: #{tpu_custom_call.1} parent=1 // pred_fallthru
      _
    // Predicated region
    $region18: #{tpu_custom_call.1} parent=1 // pred_check
      _
    $region19: #{tpu_custom_call.1} parent=1 // pred_check_branch
      %93 = sbr.rel (0) target = $region21
    $region20: #{tpu_custom_call.1} parent=1 // pred_region
      %s95 = ssub.s32 256, 256
      %96 = vsyncadd [#allocation7], %s95
      %s97 = sshll.u32 [#allocation8], 4
      %s98 = int_to_ptr.vmem [resolvable:$true] %s97
      %103 = dma.vmem_to_hbm [thread:$0]  %s98, 256, %s3, [#allocation7], 128, 128, 8
    $region21: #{tpu_custom_call.1} parent=1 // pred_fallthru
      _
    // Predicated region
    $region22: #{tpu_custom_call.1} parent=1 // pred_check
      _
    $region23: #{tpu_custom_call.1} parent=1 // pred_check_branch
      %105 = sbr.rel (0) target = $region25
    $region24: #{tpu_custom_call.1} parent=1 // pred_region
      %s107 = ssub.s32 256, 256
      %108 = vsyncadd [#allocation10], %s107
      %s109 = sshll.u32 [#allocation9], 4
      %s110 = int_to_ptr.vmem [resolvable:$true] %s109
      %115 = dma.vmem_to_hbm [thread:$0]  %s110, 256, %s4, [#allocation10], 128, 128, 8
    $region25: #{tpu_custom_call.1} parent=1 // pred_fallthru
      _
    // Predicated region
    $region26: #{tpu_custom_call.1} parent=1 // pred_check
      _
    $region27: #{tpu_custom_call.1} parent=1 // pred_check_branch
      %117 = sbr.rel (0) target = $region29
    $region28: #{tpu_custom_call.1} parent=1 // pred_region
      _
    $region29: #{tpu_custom_call.1} parent=1 // pred_fallthru
      _
    // Predicated region
    $region30: #{tpu_custom_call.1} parent=1 // pred_check
      _
    $region31: #{tpu_custom_call.1} parent=1 // pred_check_branch
      %119 = sbr.rel (0) target = $region33
    $region32: #{tpu_custom_call.1} parent=1 // pred_region
      _
    $region33: #{tpu_custom_call.1} parent=1 // pred_fallthru
      _
    // Predicated region
    $region34: #{tpu_custom_call.1} parent=1 // pred_check
      _
    $region35: #{tpu_custom_call.1} parent=1 // pred_check_branch
      %121 = sbr.rel (0) target = $region37
    $region36: #{tpu_custom_call.1} parent=1 // pred_region
      _
    $region37: #{tpu_custom_call.1} parent=1 // pred_fallthru
      _
    // Predicated region
    $region38: #{tpu_custom_call.1} parent=1 // pred_check
      _
    $region39: #{tpu_custom_call.1} parent=1 // pred_check_branch
      %123 = sbr.rel (0) target = $region41
    $region40: #{tpu_custom_call.1} parent=1 // pred_region
      %124 = dma.done [#allocation4], 256
    $region41: #{tpu_custom_call.1} parent=1 // pred_fallthru
      _
    // Predicated region
    $region42: #{tpu_custom_call.1} parent=1 // pred_check
      _
    $region43: #{tpu_custom_call.1} parent=1 // pred_check_branch
      %126 = sbr.rel (0) target = $region45
    $region44: #{tpu_custom_call.1} parent=1 // pred_region
      %127 = dma.done [#allocation7], 256
    $region45: #{tpu_custom_call.1} parent=1 // pred_fallthru
      _
    // Predicated region
    $region46: #{tpu_custom_call.1} parent=1 // pred_check
      _
    $region47: #{tpu_custom_call.1} parent=1 // pred_check_branch
      %129 = sbr.rel (0) target = $region49
    $region48: #{tpu_custom_call.1} parent=1 // pred_region
      %130 = dma.done [#allocation7], 256
    $region49: #{tpu_custom_call.1} parent=1 // pred_fallthru
      _
    // Predicated region
    $region50: #{tpu_custom_call.1} parent=1 // pred_check
      _
    $region51: #{tpu_custom_call.1} parent=1 // pred_check_branch
      %132 = sbr.rel (0) target = $region53
    $region52: #{tpu_custom_call.1} parent=1 // pred_region
      %133 = dma.done [#allocation10], 256
    $region53: #{tpu_custom_call.1} parent=1 // pred_fallthru
      _
    // Predicated region
    $region54: #{tpu_custom_call.1} parent=1 // pred_check
      _
    $region55: #{tpu_custom_call.1} parent=1 // pred_check_branch
      %135 = sbr.rel (0) target = $region57
    $region56: #{tpu_custom_call.1} parent=1 // pred_region
      _
    $region57: #{tpu_custom_call.1} parent=1 // pred_fallthru
      _
    // Predicated region
    $region58: #{tpu_custom_call.1} parent=1 // pred_check
      _
    $region59: #{tpu_custom_call.1} parent=1 // pred_check_branch
      %137 = sbr.rel (0) target = $region61
    $region60: #{tpu_custom_call.1} parent=1 // pred_region
      _
    $region61: #{tpu_custom_call.1} parent=1 // pred_fallthru
      _
    // Predicated region
    $region62: #{tpu_custom_call.1} parent=1 // pred_check
      _
    $region63: #{tpu_custom_call.1} parent=1 // pred_check_branch
      %139 = sbr.rel (0) target = $region65
    $region64: #{tpu_custom_call.1} parent=1 // pred_region
      _
    $region65: #{tpu_custom_call.1} parent=1 // pred_fallthru
      _
    %140 = vsyncpa [#allocation3], 1
    %141 = vsyncpa [#allocation4], 1
    %142 = vsyncpa [#allocation7], 1
    %143 = vsyncpa [#allocation10], 1

// kernel: tpu_custom_call.1
$region0: #{tpu_custom_call.1}
  #allocation0 [shape = 'u32[]', space=smem, size = 0x4, offset = 0x4, fixed_abs, tag = 'smem constant byte address 0x4 - core index']
  #allocation1 [shape = 'u32[144,128]{1,0:T(1,128)}', space=vmem, size = 0x12000, scoped, tag = 'internal scratch']
  %s0 = inlined_call_operand.hbm [shape: f32[16,128], index: 0, kind: input, shape index: {}]
  %s1 = inlined_call_operand.hbm [shape: f32[16,128], index: 1, kind: output, shape index: {0}]
  %s2 = inlined_call_operand.hbm [shape: f32[16,128], index: 2, kind: output, shape index: {1}]
  %s3 = inlined_call_operand.hbm [shape: f32[16,128], index: 3, kind: output, shape index: {2}]
  %s4 = inlined_call_operand.hbm [shape: f32[16,128], index: 4, kind: output, shape index: {3}]
  %s5 = inlined_call_operand.hbm [shape: u8[16,128], index: 5, kind: output, shape index: {4}]
  %s6 = inlined_call_operand.hbm [shape: u8[16,128], index: 6, kind: output, shape index: {5}]
  %s7 = inlined_call_operand.hbm [shape: u8[16,128], index: 7, kind: output, shape index: {6}]
  %8 = xla_tuple %s1, %s2, %s3, %s4, %s5, %s6, %s7
  %s9 = sld [smem:[#allocation0]]
  $region66: #{tpu_custom_call.1} parent=0
    _
  %s11 = ssub.s32 1, %s9
  %s12 = scalar_select 0, %s11, %s9
  $region1: #{tpu_custom_call.1} parent=0
    #allocation2 [shape = 'u8[8192]{0}', space=vmem, size = 0x2000, scoped, tag = 'input window, operand 0, single buffered']
    #allocation3 [shape = 's32[1]{0}', space=sflag, size = 0x4, scoped, tag = 'scoped memory for tpu_custom_call.1']
    #allocation4 [shape = 's32[1]{0}', space=sflag, size = 0x4, scoped, tag = 'scoped memory for tpu_custom_call.1']
    #allocation5 [shape = 'u8[8192]{0}', space=vmem, size = 0x2000, scoped, tag = 'output window, operand 0, single buffered']
    #allocation6 [shape = 'u8[8192]{0}', space=vmem, size = 0x2000, scoped, tag = 'output window, operand 1, single buffered']
    #allocation7 [shape = 's32[1]{0}', space=sflag, size = 0x4, scoped, tag = 'scoped memory for tpu_custom_call.1']
    #allocation8 [shape = 'u8[8192]{0}', space=vmem, size = 0x2000, scoped, tag = 'output window, operand 2, single buffered']
    #allocation9 [shape = 'u8[8192]{0}', space=vmem, size = 0x2000, scoped, tag = 'output window, operand 3, single buffered']
    #allocation10 [shape = 's32[1]{0}', space=sflag, size = 0x4, scoped, tag = 'scoped memory for tpu_custom_call.1']
    #allocation11 [shape = 'u8[2048]{0}', space=vmem, size = 0x800, scoped, tag = 'output window, operand 4, single buffered']
    #allocation12 [shape = 'u8[2048]{0}', space=vmem, size = 0x800, scoped, tag = 'output window, operand 5, single buffered']
    #allocation13 [shape = 's32[1]{0}', space=sflag, size = 0x4, scoped, tag = 'scoped memory for tpu_custom_call.1']
    #allocation14 [shape = 'u8[2048]{0}', space=vmem, size = 0x800, scoped, tag = 'output window, operand 6, single buffered']
    %13 = vsyncpa [#allocation3], 0
    %14 = vsyncpa [#allocation4], 0
    %15 = vsyncpa [#allocation7], 0
    %16 = vsyncpa [#allocation10], 0
    %17 = vsyncpa [#allocation13], 0
    // Predicated region
    $region2: #{tpu_custom_call.1} parent=1 // pred_check
      _
    $region3: #{tpu_custom_call.1} parent=1 // pred_check_branch
      %19 = sbr.rel (0) target = $region5
    $region4: #{tpu_custom_call.1} parent=1 // pred_region
      %s21 = ssub.s32 256, 256
      %22 = vsyncadd [#allocation3], %s21
      %s23 = sshll.u32 [#allocation2], 4
      %s24 = int_to_ptr.vmem [resolvable:$true] %s23
      %29 = dma.hbm_to_vmem [thread:$0]  %s0, 256, %s24, [#allocation3], 128, 128, 8
    $region5: #{tpu_custom_call.1} parent=1 // pred_fallthru
      _
    // Predicated region
    $region6: #{tpu_custom_call.1} parent=1 // pred_check
      _
    $region7: #{tpu_custom_call.1} parent=1 // pred_check_branch
      %31 = sbr.rel (0) target = $region9
    $region8: #{tpu_custom_call.1} parent=1 // pred_region
      %32 = dma.done [#allocation3], 256
    $region9: #{tpu_custom_call.1} parent=1 // pred_fallthru
      _
    %v35 = vld [vmem:[#allocation2] sm:$0xff]
    %v36 = vld [vmem:[#allocation2 + $0x8] sm:$0xff]
    %v37 = vadd.f32 %v35, 2.0
    %v38 = vadd.f32 %v36, 2.0
    %39 = vst [vmem:[#allocation5] sm:$0xff] %v37
    %40 = vst [vmem:[#allocation5 + $0x8] sm:$0xff] %v38
    %v41 = vsub.f32 %v35, 2.0
    %v42 = vsub.f32 %v36, 2.0
    %43 = vst [vmem:[#allocation6] sm:$0xff] %v41
    %44 = vst [vmem:[#allocation6 + $0x8] sm:$0xff] %v42
    %v45 = vmul.f32 %v35, 2.0
    %v46 = vmul.f32 %v36, 2.0
    %47 = vst [vmem:[#allocation8] sm:$0xff] %v45
    %48 = vst [vmem:[#allocation8 + $0x8] sm:$0xff] %v46
    %v49 = vmul.f32 %v35, 0.5
    %v50 = vmul.f32 %v36, 0.5
    %51 = vst [vmem:[#allocation9] sm:$0xff] %v49
    %52 = vst [vmem:[#allocation9 + $0x8] sm:$0xff] %v50
    %vm53 = vcmp.lt.f32.partialorder %v35, 2.0
    %vm54 = vcmp.lt.f32.partialorder %v36, 2.0
    %vm55 = vmpackc.low %vm54, %vm53
    %vm56 = vmpackc.even %vm55, %vm55
    %v57 = vsel %vm56, 16843009, 0
    %v58 = vunpack.c.0.s8 %v57
    %v59 = vunpack.c.1.s8 %v57
    %v60 = vpack.c.b16 %v58, %v58
    %v61 = vpack.c.b8 %v60, %v60
    %v62 = vpack.c.b16 %v59, %v59
    %v63 = vpack.c.b8 %v62, %v62
    %64 = vst [vmem:[#allocation11] sm:$0x3] %v61
    %65 = vst [vmem:[#allocation11 + $0x2] sm:$0x3] %v63
    %vm66 = vcmp.gt.f32.partialorder %v35, 2.0
    %vm67 = vcmp.gt.f32.partialorder %v36, 2.0
    %vm68 = vmpackc.low %vm67, %vm66
    %vm69 = vmpackc.even %vm68, %vm68
    %v70 = vsel %vm69, 16843009, 0
    %v71 = vunpack.c.0.s8 %v70
    %v72 = vunpack.c.1.s8 %v70
    %v73 = vpack.c.b16 %v71, %v71
    %v74 = vpack.c.b8 %v73, %v73
    %v75 = vpack.c.b16 %v72, %v72
    %v76 = vpack.c.b8 %v75, %v75
    %77 = vst [vmem:[#allocation12] sm:$0x3] %v74
    %78 = vst [vmem:[#allocation12 + $0x2] sm:$0x3] %v76
    %vm79 = vcmp.eq.f32.partialorder %v35, 2.0
    %vm80 = vcmp.eq.f32.partialorder %v36, 2.0
    %vm81 = vmpackc.low %vm80, %vm79
    %vm82 = vmpackc.even %vm81, %vm81
    %v83 = vsel %vm82, 16843009, 0
    %v84 = vunpack.c.0.s8 %v83
    %v85 = vunpack.c.1.s8 %v83
    %v86 = vpack.c.b16 %v84, %v84
    %v87 = vpack.c.b8 %v86, %v86
    %v88 = vpack.c.b16 %v85, %v85
    %v89 = vpack.c.b8 %v88, %v88
    %90 = vst [vmem:[#allocation14] sm:$0x3] %v87
    %91 = vst [vmem:[#allocation14 + $0x2] sm:$0x3] %v89
    // Predicated region
    $region10: #{tpu_custom_call.1} parent=1 // pred_check
      _
    $region11: #{tpu_custom_call.1} parent=1 // pred_check_branch
      %93 = sbr.rel (0) target = $region13
    $region12: #{tpu_custom_call.1} parent=1 // pred_region
      %s95 = ssub.s32 256, 256
      %96 = vsyncadd [#allocation4], %s95
      %s97 = sshll.u32 [#allocation5], 4
      %s98 = int_to_ptr.vmem [resolvable:$true] %s97
      %103 = dma.vmem_to_hbm [thread:$0]  %s98, 256, %s1, [#allocation4], 128, 128, 8
    $region13: #{tpu_custom_call.1} parent=1 // pred_fallthru
      _
    // Predicated region
    $region14: #{tpu_custom_call.1} parent=1 // pred_check
      _
    $region15: #{tpu_custom_call.1} parent=1 // pred_check_branch
      %105 = sbr.rel (0) target = $region17
    $region16: #{tpu_custom_call.1} parent=1 // pred_region
      %s107 = ssub.s32 256, 256
      %108 = vsyncadd [#allocation7], %s107
      %s109 = sshll.u32 [#allocation6], 4
      %s110 = int_to_ptr.vmem [resolvable:$true] %s109
      %115 = dma.vmem_to_hbm [thread:$0]  %s110, 256, %s2, [#allocation7], 128, 128, 8
    $region17: #{tpu_custom_call.1} parent=1 // pred_fallthru
      _
    // Predicated region
    $region18: #{tpu_custom_call.1} parent=1 // pred_check
      _
    $region19: #{tpu_custom_call.1} parent=1 // pred_check_branch
      %117 = sbr.rel (0) target = $region21
    $region20: #{tpu_custom_call.1} parent=1 // pred_region
      %s119 = ssub.s32 256, 256
      %120 = vsyncadd [#allocation7], %s119
      %s121 = sshll.u32 [#allocation8], 4
      %s122 = int_to_ptr.vmem [resolvable:$true] %s121
      %127 = dma.vmem_to_hbm [thread:$0]  %s122, 256, %s3, [#allocation7], 128, 128, 8
    $region21: #{tpu_custom_call.1} parent=1 // pred_fallthru
      _
    // Predicated region
    $region22: #{tpu_custom_call.1} parent=1 // pred_check
      _
    $region23: #{tpu_custom_call.1} parent=1 // pred_check_branch
      %129 = sbr.rel (0) target = $region25
    $region24: #{tpu_custom_call.1} parent=1 // pred_region
      %s131 = ssub.s32 256, 256
      %132 = vsyncadd [#allocation10], %s131
      %s133 = sshll.u32 [#allocation9], 4
      %s134 = int_to_ptr.vmem [resolvable:$true] %s133
      %139 = dma.vmem_to_hbm [thread:$0]  %s134, 256, %s4, [#allocation10], 128, 128, 8
    $region25: #{tpu_custom_call.1} parent=1 // pred_fallthru
      _
    // Predicated region
    $region26: #{tpu_custom_call.1} parent=1 // pred_check
      _
    $region27: #{tpu_custom_call.1} parent=1 // pred_check_branch
      %141 = sbr.rel (0) target = $region29
    $region28: #{tpu_custom_call.1} parent=1 // pred_region
      %s143 = ssub.s32 64, 64
      %144 = vsyncadd [#allocation10], %s143
      %s145 = sshll.u32 [#allocation11], 4
      %s146 = int_to_ptr.vmem [resolvable:$true] %s145
      %151 = dma.vmem_to_hbm [thread:$0]  %s146, 64, %s5, [#allocation10], 32, 32, 2
    $region29: #{tpu_custom_call.1} parent=1 // pred_fallthru
      _
    // Predicated region
    $region30: #{tpu_custom_call.1} parent=1 // pred_check
      _
    $region31: #{tpu_custom_call.1} parent=1 // pred_check_branch
      %153 = sbr.rel (0) target = $region33
    $region32: #{tpu_custom_call.1} parent=1 // pred_region
      %s155 = ssub.s32 64, 64
      %156 = vsyncadd [#allocation13], %s155
      %s157 = sshll.u32 [#allocation12], 4
      %s158 = int_to_ptr.vmem [resolvable:$true] %s157
      %163 = dma.vmem_to_hbm [thread:$0]  %s158, 64, %s6, [#allocation13], 32, 32, 2
    $region33: #{tpu_custom_call.1} parent=1 // pred_fallthru
      _
    // Predicated region
    $region34: #{tpu_custom_call.1} parent=1 // pred_check
      _
    $region35: #{tpu_custom_call.1} parent=1 // pred_check_branch
      %165 = sbr.rel (0) target = $region37
    $region36: #{tpu_custom_call.1} parent=1 // pred_region
      %s167 = ssub.s32 64, 64
      %168 = vsyncadd [#allocation13], %s167
      %s169 = sshll.u32 [#allocation14], 4
      %s170 = int_to_ptr.vmem [resolvable:$true] %s169
      %175 = dma.vmem_to_hbm [thread:$0]  %s170, 64, %s7, [#allocation13], 32, 32, 2
    $region37: #{tpu_custom_call.1} parent=1 // pred_fallthru
      _
    // Predicated region
    $region38: #{tpu_custom_call.1} parent=1 // pred_check
      _
    $region39: #{tpu_custom_call.1} parent=1 // pred_check_branch
      %177 = sbr.rel (0) target = $region41
    $region40: #{tpu_custom_call.1} parent=1 // pred_region
      %178 = dma.done [#allocation4], 256
    $region41: #{tpu_custom_call.1} parent=1 // pred_fallthru
      _
    // Predicated region
    $region42: #{tpu_custom_call.1} parent=1 // pred_check
      _
    $region43: #{tpu_custom_call.1} parent=1 // pred_check_branch
      %180 = sbr.rel (0) target = $region45
    $region44: #{tpu_custom_call.1} parent=1 // pred_region
      %181 = dma.done [#allocation7], 256
    $region45: #{tpu_custom_call.1} parent=1 // pred_fallthru
      _
    // Predicated region
    $region46: #{tpu_custom_call.1} parent=1 // pred_check
      _
    $region47: #{tpu_custom_call.1} parent=1 // pred_check_branch
      %183 = sbr.rel (0) target = $region49
    $region48: #{tpu_custom_call.1} parent=1 // pred_region
      %184 = dma.done [#allocation7], 256
    $region49: #{tpu_custom_call.1} parent=1 // pred_fallthru
      _
    // Predicated region
    $region50: #{tpu_custom_call.1} parent=1 // pred_check
      _
    $region51: #{tpu_custom_call.1} parent=1 // pred_check_branch
      %186 = sbr.rel (0) target = $region53
    $region52: #{tpu_custom_call.1} parent=1 // pred_region
      %187 = dma.done [#allocation10], 256
    $region53: #{tpu_custom_call.1} parent=1 // pred_fallthru
      _
    // Predicated region
    $region54: #{tpu_custom_call.1} parent=1 // pred_check
      _
    $region55: #{tpu_custom_call.1} parent=1 // pred_check_branch
      %189 = sbr.rel (0) target = $region57
    $region56: #{tpu_custom_call.1} parent=1 // pred_region
      %190 = dma.done [#allocation10], 64
    $region57: #{tpu_custom_call.1} parent=1 // pred_fallthru
      _
    // Predicated region
    $region58: #{tpu_custom_call.1} parent=1 // pred_check
      _
    $region59: #{tpu_custom_call.1} parent=1 // pred_check_branch
      %192 = sbr.rel (0) target = $region61
    $region60: #{tpu_custom_call.1} parent=1 // pred_region
      %193 = dma.done [#allocation13], 64
    $region61: #{tpu_custom_call.1} parent=1 // pred_fallthru
      _
    // Predicated region
    $region62: #{tpu_custom_call.1} parent=1 // pred_check
      _
    $region63: #{tpu_custom_call.1} parent=1 // pred_check_branch
      %195 = sbr.rel (0) target = $region65
    $region64: #{tpu_custom_call.1} parent=1 // pred_region
      %196 = dma.done [#allocation13], 64
    $region65: #{tpu_custom_call.1} parent=1 // pred_fallthru
      _
    %197 = vsyncpa [#allocation3], 1
    %198 = vsyncpa [#allocation4], 1
    %199 = vsyncpa [#allocation7], 1
    %200 = vsyncpa [#allocation10], 1
    %201 = vsyncpa [#allocation13], 1

</llo_original>
